<compile_context>
chip_gen: v5e
topology: v5e:2x2
jax: 0.10.0
libtpu: 0.0.40
codegen_flags: <defaults>
</compile_context>

<pallas_src>
import functools

import jax
import jax.numpy as jnp
from jax.experimental import pallas as pl
from jax.experimental.pallas import tpu as pltpu


_NEG_INF = -1e30
_MIB = 1024 * 1024


def _round_up(x, m):
    return ((x + m - 1) // m) * m


def _query_vmem_capacity_bytes():
    """Per-core VMEM capacity (v5e/v6e: 128 MiB, v7x: 64 MiB). Conservative fallback."""
    try:
        info = pltpu.get_tpu_info()
        cap = getattr(info, "vmem_capacity_bytes", None)
        if cap:
            return int(cap)
    except Exception:
        pass
    return 64 * _MIB  # assume the smallest generation (v7x per-TC)


_VMEM_CAP_BYTES = _query_vmem_capacity_bytes()


def bengio_kernel(x_ref, w_ref, bsum_ref, wd_ref, bd_ref,
                  logits_ref, lse_ref, hid_sc, m_sc, l_sc):
    """One (row-tile r, vocab-tile v) step of the fused Bengio NNLM forward.

    x_ref     : (TM, Kp)  bf16  shifted-window embeddings (K = in_len*E, padded)
    w_ref     : (Kp, Hp)  bf16  flattened projection weights (constant block)
    bsum_ref  : (1,  Hp)  f32   summed projection biases     (constant block)
    wd_ref    : (Hp, TV)  bf16  decoder weight tile for vocab block v
    bd_ref    : (1,  TV)  f32   decoder bias tile (-1e30 on padded vocab lanes)
    logits_ref: (TM, TV)  bf16  un-normalized logits output tile
    lse_ref   : (TM, 1)   f32   per-row logsumexp (written at the last v step)
    hid_sc    : (TM, Hp)  bf16  hidden activations, computed once per row tile
    m_sc,l_sc : (TM, 1)   f32   online-logsumexp running max / running sum
    """
    v = pl.program_id(1)

    @pl.when(v == 0)
    def _():
        # Fused K = in_len*E projection matmul; f32 accumulation on the MXU.
        acc = jnp.dot(x_ref[...], w_ref[...], preferred_element_type=jnp.float32)
        hid_sc[...] = jnp.tanh(acc + bsum_ref[...]).astype(hid_sc.dtype)
        m_sc[...] = jnp.full_like(m_sc, -jnp.inf)
        l_sc[...] = jnp.zeros_like(l_sc)

    # Decoder matmul on this vocab tile (bf16 in, f32 accumulate).
    logits = jnp.dot(hid_sc[...], wd_ref[...], preferred_element_type=jnp.float32)
    logits = logits + bd_ref[...]                                  # (TM, TV) f32

    # Online logsumexp across vocab tiles.
    m_prev = m_sc[...]
    m_new = jnp.maximum(m_prev, jnp.max(logits, axis=-1, keepdims=True))
    l_sc[...] = (jnp.exp(m_prev - m_new) * l_sc[...]
                 + jnp.sum(jnp.exp(logits - m_new), axis=-1, keepdims=True))
    m_sc[...] = m_new

    # bf16 logits output: halves the dominant HBM writeback stream.
    logits_ref[...] = logits.astype(logits_ref.dtype)

    @pl.when(v == pl.num_programs(1) - 1)
    def _():
        lse_ref[...] = m_sc[...] + jnp.log(l_sc[...])


@functools.partial(jax.jit, static_argnames=("in_len",))
def bengio_forward(emb, w_stack, b_sum, w_dec, b_dec, *, in_len):
    """emb: (B, S, E) f32. Returns log-probs (B, L, V), L = S - in_len + 1."""
    B, S, E = emb.shape
    L = S - in_len + 1
    K = in_len * E
    H = w_stack.shape[-1]
    V = w_dec.shape[-1]
    R = B * L

    big_vmem = _VMEM_CAP_BYTES >= 100 * _MIB  # v5e/v6e (128 MiB) vs v7x (64 MiB)

    # ---- padded, lane-dense sizes -----------------------------------------
    Kp = _round_up(K, 128)
    Hp = _round_up(H, 128)
    tv_target = 1024 if big_vmem else 512
    Vp = _round_up(V, 128)
    if Vp <= tv_target:
        TV = Vp
    else:
        TV = tv_target
        Vp = _round_up(V, TV)          # TV must divide Vp

    # Row tile: fill the MXU M dimension; keep >=2 row tiles when R allows so
    # the "parallel" row axis can be sharded across v7x's two TensorCores.
    base_tm = 512 if big_vmem else 256
    if R <= 16:
        TM = _round_up(R, 16)
    else:
        TM = min(base_tm, _round_up((R + 1) // 2, 16))
    Rp = _round_up(R, TM)

    # ---- wrapper-side layout plumbing (all inside jit; fused by XLA) -------
    # Shifted windows built directly in bf16: X[b*L+t, i*E:(i+1)*E] = emb[b, t+i].
    emb_bf = emb.astype(jnp.bfloat16)
    x = jnp.concatenate([emb_bf[:, i:i + L, :] for i in range(in_len)], axis=-1)
    x = x.reshape(R, K)

    x_p = jnp.pad(x, ((0, Rp - R), (0, Kp - K)))
    w_p = jnp.pad(w_stack.reshape(K, H).astype(jnp.bfloat16),
                  ((0, Kp - K), (0, Hp - H)))
    bsum_p = jnp.pad(b_sum.astype(jnp.float32), ((0, 0), (0, Hp - H)))
    wd_p = jnp.pad(w_dec.astype(jnp.bfloat16), ((0, Hp - H), (0, Vp - V)))
    # Padded vocab lanes get a huge negative bias -> zero probability mass.
    bd_p = jnp.pad(b_dec.astype(jnp.float32), ((0, 0), (0, Vp - V)),
                   constant_values=_NEG_INF)

    # ---- VMEM budget: matches the actual double-buffered tiles + scratch ---
    needed = (
        2 * TM * Kp * 2          # x tile (bf16, double-buffered)
        + 2 * Kp * Hp * 2        # projection weight (constant block index)
        + 2 * Hp * 4             # summed projection bias
        + 2 * Hp * TV * 2        # decoder weight tile
        + 2 * TV * 4             # decoder bias tile
        + 2 * TM * TV * 2        # bf16 logits output tile
        + 2 * TM * 4             # lse output tile
        + TM * Hp * 2            # hidden scratch (bf16)
        + 2 * TM * 4             # m / l scratch
        + TM * Hp * 4            # f32 projection accumulator (v == 0)
        + 3 * TM * TV * 4        # f32 logits / exp temporaries
    )
    # Cap: leave Mosaic-internal headroom below physical VMEM (48 MiB on v7x,
    # 112 MiB on v5e/v6e); floor of 32 MiB so double-buffering always fits.
    vmem_cap = max(32 * _MIB, _VMEM_CAP_BYTES - 16 * _MIB)
    vmem_limit = int(min(vmem_cap, max(32 * _MIB, int(needed * 1.25))))

    grid_spec = pltpu.PrefetchScalarGridSpec(
        num_scalar_prefetch=0,
        grid=(Rp // TM, Vp // TV),
        in_specs=[
            pl.BlockSpec((TM, Kp), lambda r, v: (r, 0)),   # x rows
            pl.BlockSpec((Kp, Hp), lambda r, v: (0, 0)),   # projection weight
            pl.BlockSpec((1, Hp), lambda r, v: (0, 0)),    # summed proj bias
            pl.BlockSpec((Hp, TV), lambda r, v: (0, v)),   # decoder weight tile
            pl.BlockSpec((1, TV), lambda r, v: (0, v)),    # decoder bias tile
        ],
        out_specs=[
            pl.BlockSpec((TM, TV), lambda r, v: (r, v)),   # bf16 logits
            pl.BlockSpec((TM, 1), lambda r, v: (r, 0)),    # f32 lse (per row)
        ],
        scratch_shapes=[
            pltpu.VMEM((TM, Hp), jnp.bfloat16),            # hidden (reused over v)
            pltpu.VMEM((TM, 1), jnp.float32),              # running max
            pltpu.VMEM((TM, 1), jnp.float32),              # running sum
        ],
    )

    logits_p, lse_p = pl.pallas_call(
        bengio_kernel,
        out_shape=(jax.ShapeDtypeStruct((Rp, Vp), jnp.bfloat16),
                   jax.ShapeDtypeStruct((Rp, 1), jnp.float32)),
        grid_spec=grid_spec,
        compiler_params=pltpu.CompilerParams(
            dimension_semantics=("parallel", "arbitrary"),
            vmem_limit_bytes=vmem_limit,
        ),
    )(x_p, w_p, bsum_p, wd_p, bd_p)

    # Cheap follow-up elementwise normalization (fused by XLA); downstream code
    # could consume (bf16 logits, f32 lse) directly and skip this stream.
    out = logits_p[:R, :V].astype(jnp.float32) - lse_p[:R, :]
    return out.reshape(B, L, V)


def make_params(key, ntoken, emb_size, in_len, nb_hidden):
    """Deterministic parameter init mirroring BengioModel.__init__/init_weights."""
    k_enc, k_e2h_w, k_e2h_b, k_dec = jax.random.split(key, 4)
    initrange = 0.1
    # Embedding table (ntoken, emb_size), uniform(-0.1, 0.1)
    enc_w = jax.random.uniform(k_enc, (ntoken, emb_size), jnp.float32,
                               -initrange, initrange)
    # emb2h weights: PyTorch Linear weight is (H, E); we store W_i^T = (E, H)
    e2h_w = jax.random.uniform(k_e2h_w, (in_len, nb_hidden, emb_size), jnp.float32,
                               -initrange, initrange)
    w_stack = jnp.transpose(e2h_w, (0, 2, 1))  # (in_len, E, H)
    # emb2h biases (not re-initialized in init_weights; default-style uniform)
    bound = 1.0 / jnp.sqrt(emb_size)
    e2h_b = jax.random.uniform(k_e2h_b, (in_len, nb_hidden), jnp.float32, -bound, bound)
    b_sum = jnp.sum(e2h_b, axis=0, keepdims=True)  # (1, H) — biases sum linearly
    # decoder: weight (ntoken, H) uniform(-0.1, 0.1), bias zeros
    dec_w = jax.random.uniform(k_dec, (ntoken, nb_hidden), jnp.float32,
                               -initrange, initrange)
    w_dec = dec_w.T  # (H, V)
    b_dec = jnp.zeros((1, ntoken), jnp.float32)
    return enc_w, w_stack, b_sum, w_dec, b_dec


def reference_forward(tokens, enc_w, w_stack, b_sum, w_dec, b_dec, in_len,
                      quantize=False):
    emb = enc_w[tokens]  # (B, S, E)
    S = emb.shape[1]
    L = S - in_len + 1
    if quantize:  # mirror the kernel's bf16-inputs / f32-accumulation numerics
        emb = emb.astype(jnp.bfloat16)
        w_stack = w_stack.astype(jnp.bfloat16)
        w_dec = w_dec.astype(jnp.bfloat16)
    acc = sum(jnp.einsum("ble,eh->blh", emb[:, i:i + L], w_stack[i],
                         preferred_element_type=jnp.float32)
              for i in range(in_len))
    hidden = jnp.tanh(acc + b_sum.reshape(1, 1, -1))
    if quantize:
        hidden = hidden.astype(jnp.bfloat16)
    logits = jnp.einsum("blh,hv->blv", hidden, w_dec,
                        preferred_element_type=jnp.float32) + b_dec.reshape(1, 1, -1)
    if quantize:
        # Mirror the kernel's (bf16 logits, f32 lse) output path.
        lse = jax.scipy.special.logsumexp(logits, axis=-1, keepdims=True)
        return logits.astype(jnp.bfloat16).astype(jnp.float32) - lse
    return jax.nn.log_softmax(logits, axis=-1)


if __name__ == "__main__":
    # Small shapes consistent with the module
    ntoken, emb_size, in_len, nb_hidden = 32, 16, 3, 32
    batch, seq = 2, 8

    key = jax.random.PRNGKey(0)
    k_params, k_tok = jax.random.split(key)
    enc_w, w_stack, b_sum, w_dec, b_dec = make_params(
        k_params, ntoken, emb_size, in_len, nb_hidden)

    tokens = jax.random.randint(k_tok, (batch, seq), 0, ntoken)  # (B, S) int ids
    hidden0 = jnp.zeros((1, batch, nb_hidden), jnp.float32)      # "hidden" passthrough

    # Embedding lookup (gather) as plain-JAX glue; hot path is the Pallas kernel.
    emb = enc_w[tokens]  # (B, S, E)

    decoded = bengio_forward(emb, w_stack, b_sum, w_dec, b_dec, in_len=in_len)
    decoded = jax.block_until_ready(decoded)

    L = seq - in_len + 1
    assert decoded.shape == (batch, L, ntoken)

    # Tight check vs a reference with the same quantization path as the kernel...
    ref_bf16 = reference_forward(tokens, enc_w, w_stack, b_sum, w_dec, b_dec,
                                 in_len, quantize=True)
    assert jnp.allclose(decoded, ref_bf16, atol=5e-3), "mismatch vs bf16 reference"
    # ...and a loose sanity check vs the full-f32 reference.
    ref_f32 = reference_forward(tokens, enc_w, w_stack, b_sum, w_dec, b_dec,
                                in_len, quantize=False)
    assert jnp.allclose(decoded, ref_f32, atol=5e-2), "mismatch vs f32 reference"

    # (decoded, hidden) is the module's return; hidden is passed through unchanged.
    _ = hidden0

    print("KERNEL_OK")
</pallas_src>

<mosaic_0001>
module attributes {stable_mosaic.version = 11 : i64} {
  func.func @bengio_kernel(%arg0: i32, %arg1: i32, %arg2: memref<16x128xbf16, #tpu.memory_space<vmem>>, %arg3: memref<128x128xbf16, #tpu.memory_space<vmem>>, %arg4: memref<1x128xf32, #tpu.memory_space<vmem>>, %arg5: memref<128x128xbf16, #tpu.memory_space<vmem>>, %arg6: memref<1x128xf32, #tpu.memory_space<vmem>>, %arg7: memref<16x128xbf16, #tpu.memory_space<vmem>>, %arg8: memref<16x1xf32, #tpu.memory_space<vmem>>, %arg9: memref<16x128xbf16, #tpu.memory_space<vmem>>, %arg10: memref<16x1xf32, #tpu.memory_space<vmem>>, %arg11: memref<16x1xf32, #tpu.memory_space<vmem>>) attributes {dimension_semantics = [#tpu.dimension_semantics<parallel>, #tpu.dimension_semantics<arbitrary>], iteration_bounds = array<i64: 1, 1>, scalar_prefetch = 0 : i64, scratch_operands = 3 : i64, tpu.core_type = #tpu.core_type<tc>, window_params = [{transform_indices = @transform_0, window_bounds = array<i64: 16, 128>}, {pipeline_mode = #tpu.pipeline_mode<synchronous>, transform_indices = @transform_1, window_bounds = array<i64: 128, 128>}, {pipeline_mode = #tpu.pipeline_mode<synchronous>, transform_indices = @transform_2, window_bounds = array<i64: 1, 128>}, {transform_indices = @transform_3, window_bounds = array<i64: 128, 128>}, {transform_indices = @transform_4, window_bounds = array<i64: 1, 128>}, {transform_indices = @transform_5, window_bounds = array<i64: 16, 128>}, {transform_indices = @transform_6, window_bounds = array<i64: 16, 1>}]} {
    %c0_i32 = arith.constant 0 : i32
    %0 = arith.cmpi eq, %arg1, %c0_i32 : i32
    %1 = arith.extui %0 : i1 to i32
    %c0_i32_0 = arith.constant 0 : i32
    %2 = arith.cmpi ne, %1, %c0_i32_0 : i32
    scf.if %2 {
      %c0_20 = arith.constant 0 : index
      %c0_21 = arith.constant 0 : index
      %30 = vector.load %arg2[%c0_20, %c0_21] : memref<16x128xbf16, #tpu.memory_space<vmem>>, vector<16x128xbf16>
      %c0_22 = arith.constant 0 : index
      %c0_23 = arith.constant 0 : index
      %31 = vector.load %arg3[%c0_22, %c0_23] : memref<128x128xbf16, #tpu.memory_space<vmem>>, vector<128x128xbf16>
      %cst_24 = arith.constant dense<0.000000e+00> : vector<16x128xf32>
      %32 = tpu.matmul %30, %31, %cst_24 {dimension_numbers = #tpu.dot_dimension_numbers<[1], [0], [0], [1], [0, 0, 1, 1], [], []>} : vector<16x128xbf16>, vector<128x128xbf16>, vector<16x128xf32> -> vector<16x128xf32>
      %c0_25 = arith.constant 0 : index
      %c0_26 = arith.constant 0 : index
      %33 = vector.load %arg4[%c0_25, %c0_26] : memref<1x128xf32, #tpu.memory_space<vmem>>, vector<1x128xf32>
      %34 = vector.broadcast %33 : vector<1x128xf32> to vector<16x128xf32>
      %35 = arith.addf %32, %34 : vector<16x128xf32>
      %36 = math.tanh %35 : vector<16x128xf32>
      %37 = arith.truncf %36 : vector<16x128xf32> to vector<16x128xbf16>
      %c0_27 = arith.constant 0 : index
      %c0_28 = arith.constant 0 : index
      %38 = vector.load %arg9[%c0_27, %c0_28] : memref<16x128xbf16, #tpu.memory_space<vmem>>, vector<16x128xbf16>
      tpu.vector_store %arg9[%c0_27, %c0_28], %37 {strides = array<i32>} : memref<16x128xbf16, #tpu.memory_space<vmem>>, vector<16x128xbf16>,
      %cst_29 = arith.constant 0xFF800000 : f32
      %39 = vector.broadcast %cst_29 : f32 to vector<16x1xf32>
      %c0_30 = arith.constant 0 : index
      %c0_31 = arith.constant 0 : index
      %40 = vector.load %arg10[%c0_30, %c0_31] : memref<16x1xf32, #tpu.memory_space<vmem>>, vector<16x1xf32>
      tpu.vector_store %arg10[%c0_30, %c0_31], %39 {strides = array<i32>} : memref<16x1xf32, #tpu.memory_space<vmem>>, vector<16x1xf32>,
      %cst_32 = arith.constant 0.000000e+00 : f32
      %41 = vector.broadcast %cst_32 : f32 to vector<16x1xf32>
      %c0_33 = arith.constant 0 : index
      %c0_34 = arith.constant 0 : index
      %42 = vector.load %arg11[%c0_33, %c0_34] : memref<16x1xf32, #tpu.memory_space<vmem>>, vector<16x1xf32>
      tpu.vector_store %arg11[%c0_33, %c0_34], %41 {strides = array<i32>} : memref<16x1xf32, #tpu.memory_space<vmem>>, vector<16x1xf32>,
    } else {
    }
    %c0 = arith.constant 0 : index
    %c0_1 = arith.constant 0 : index
    %3 = vector.load %arg9[%c0, %c0_1] : memref<16x128xbf16, #tpu.memory_space<vmem>>, vector<16x128xbf16>
    %c0_2 = arith.constant 0 : index
    %c0_3 = arith.constant 0 : index
    %4 = vector.load %arg5[%c0_2, %c0_3] : memref<128x128xbf16, #tpu.memory_space<vmem>>, vector<128x128xbf16>
    %cst = arith.constant dense<0.000000e+00> : vector<16x128xf32>
    %5 = tpu.matmul %3, %4, %cst {dimension_numbers = #tpu.dot_dimension_numbers<[1], [0], [0], [1], [0, 0, 1, 1], [], []>} : vector<16x128xbf16>, vector<128x128xbf16>, vector<16x128xf32> -> vector<16x128xf32>
    %c0_4 = arith.constant 0 : index
    %c0_5 = arith.constant 0 : index
    %6 = vector.load %arg6[%c0_4, %c0_5] : memref<1x128xf32, #tpu.memory_space<vmem>>, vector<1x128xf32>
    %7 = vector.broadcast %6 : vector<1x128xf32> to vector<16x128xf32>
    %8 = arith.addf %5, %7 : vector<16x128xf32>
    %c0_6 = arith.constant 0 : index
    %c0_7 = arith.constant 0 : index
    %9 = vector.load %arg10[%c0_6, %c0_7] : memref<16x1xf32, #tpu.memory_space<vmem>>, vector<16x1xf32>
    %cst_8 = arith.constant dense<0xFF800000> : vector<16xf32>
    %10 = vector.multi_reduction <maximumf>, %8, %cst_8 [1] : vector<16x128xf32> to vector<16xf32>
    %11 = vector.shape_cast %10 : vector<16xf32> to vector<16x1xf32>
    %12 = arith.maximumf %9, %11 : vector<16x1xf32>
    %13 = arith.subf %9, %12 : vector<16x1xf32>
    %14 = math.exp %13 : vector<16x1xf32>
    %c0_9 = arith.constant 0 : index
    %c0_10 = arith.constant 0 : index
    %15 = vector.load %arg11[%c0_9, %c0_10] : memref<16x1xf32, #tpu.memory_space<vmem>>, vector<16x1xf32>
    %16 = arith.mulf %14, %15 : vector<16x1xf32>
    %17 = vector.broadcast %12 : vector<16x1xf32> to vector<16x128xf32>
    %18 = arith.subf %8, %17 : vector<16x128xf32>
    %19 = math.exp %18 : vector<16x128xf32>
    %cst_11 = arith.constant dense<0.000000e+00> : vector<16xf32>
    %20 = vector.multi_reduction <add>, %19, %cst_11 [1] : vector<16x128xf32> to vector<16xf32>
    %21 = vector.shape_cast %20 : vector<16xf32> to vector<16x1xf32>
    %22 = arith.addf %16, %21 : vector<16x1xf32>
    %c0_12 = arith.constant 0 : index
    %c0_13 = arith.constant 0 : index
    %23 = vector.load %arg11[%c0_12, %c0_13] : memref<16x1xf32, #tpu.memory_space<vmem>>, vector<16x1xf32>
    tpu.vector_store %arg11[%c0_12, %c0_13], %22 {strides = array<i32>} : memref<16x1xf32, #tpu.memory_space<vmem>>, vector<16x1xf32>,
    %c0_14 = arith.constant 0 : index
    %c0_15 = arith.constant 0 : index
    %24 = vector.load %arg10[%c0_14, %c0_15] : memref<16x1xf32, #tpu.memory_space<vmem>>, vector<16x1xf32>
    tpu.vector_store %arg10[%c0_14, %c0_15], %12 {strides = array<i32>} : memref<16x1xf32, #tpu.memory_space<vmem>>, vector<16x1xf32>,
    %25 = arith.truncf %8 : vector<16x128xf32> to vector<16x128xbf16>
    %c0_16 = arith.constant 0 : index
    %c0_17 = arith.constant 0 : index
    %26 = vector.load %arg7[%c0_16, %c0_17] : memref<16x128xbf16, #tpu.memory_space<vmem>>, vector<16x128xbf16>
    tpu.vector_store %arg7[%c0_16, %c0_17], %25 {strides = array<i32>} : memref<16x128xbf16, #tpu.memory_space<vmem>>, vector<16x128xbf16>,
    %c0_i32_18 = arith.constant 0 : i32
    %27 = arith.cmpi eq, %arg1, %c0_i32_18 : i32
    %28 = arith.extui %27 : i1 to i32
    %c0_i32_19 = arith.constant 0 : i32
    %29 = arith.cmpi ne, %28, %c0_i32_19 : i32
    scf.if %29 {
      %c0_20 = arith.constant 0 : index
      %c0_21 = arith.constant 0 : index
      %30 = vector.load %arg10[%c0_20, %c0_21] : memref<16x1xf32, #tpu.memory_space<vmem>>, vector<16x1xf32>
      %c0_22 = arith.constant 0 : index
      %c0_23 = arith.constant 0 : index
      %31 = vector.load %arg11[%c0_22, %c0_23] : memref<16x1xf32, #tpu.memory_space<vmem>>, vector<16x1xf32>
      %32 = math.log %31 : vector<16x1xf32>
      %33 = arith.addf %30, %32 : vector<16x1xf32>
      %c0_24 = arith.constant 0 : index
      %c0_25 = arith.constant 0 : index
      %34 = vector.load %arg8[%c0_24, %c0_25] : memref<16x1xf32, #tpu.memory_space<vmem>>, vector<16x1xf32>
      tpu.vector_store %arg8[%c0_24, %c0_25], %33 {strides = array<i32>} : memref<16x1xf32, #tpu.memory_space<vmem>>, vector<16x1xf32>,
    } else {
    }
    return
  }
  func.func @transform_0(%arg0: i32, %arg1: i32) -> (i32, i32) {
    %c0_i32 = arith.constant 0 : i32
    %c0_i32_0 = arith.constant 0 : i32
    return %arg0, %c0_i32 : i32, i32
  }
  func.func @transform_1(%arg0: i32, %arg1: i32) -> (i32, i32) {
    %c0_i32 = arith.constant 0 : i32
    %c0_i32_0 = arith.constant 0 : i32
    %c0_i32_1 = arith.constant 0 : i32
    return %c0_i32, %c0_i32_0 : i32, i32
  }
  func.func @transform_2(%arg0: i32, %arg1: i32) -> (i32, i32) {
    %c0_i32 = arith.constant 0 : i32
    %c0_i32_0 = arith.constant 0 : i32
    %c0_i32_1 = arith.constant 0 : i32
    return %c0_i32, %c0_i32_0 : i32, i32
  }
  func.func @transform_3(%arg0: i32, %arg1: i32) -> (i32, i32) {
    %c0_i32 = arith.constant 0 : i32
    %c0_i32_0 = arith.constant 0 : i32
    return %c0_i32, %arg1 : i32, i32
  }
  func.func @transform_4(%arg0: i32, %arg1: i32) -> (i32, i32) {
    %c0_i32 = arith.constant 0 : i32
    %c0_i32_0 = arith.constant 0 : i32
    return %c0_i32, %arg1 : i32, i32
  }
  func.func @transform_5(%arg0: i32, %arg1: i32) -> (i32, i32) {
    %c0_i32 = arith.constant 0 : i32
    return %arg0, %arg1 : i32, i32
  }
  func.func @transform_6(%arg0: i32, %arg1: i32) -> (i32, i32) {
    %c0_i32 = arith.constant 0 : i32
    %c0_i32_0 = arith.constant 0 : i32
    return %arg0, %c0_i32 : i32, i32
  }
}

</mosaic_0001>

<llo_original>
// kernel: bengio_forward.1
$region0: #{bengio_forward.1}
  #allocation0 [shape = 'u32[]', space=smem, size = 0x4, offset = 0x4, fixed_abs, tag = 'smem constant byte address 0x4 - core index']
  #allocation1 [shape = 'u32[72,128]{1,0:T(1,128)}', space=vmem, size = 0x9000, scoped, tag = 'internal scratch']
  #allocation2 [shape = 'bf16[16,128]{1,0:T(8,128)(2,1)}', space=vmem, size = 0x1000, scoped, tag = 'scratch operand']
  #allocation3 [shape = 'f32[16,1]{1,0:T(8,128)}', space=vmem, size = 0x2000, scoped, tag = 'scratch operand']
  #allocation4 [shape = 'f32[16,1]{1,0:T(8,128)}', space=vmem, size = 0x2000, scoped, tag = 'scratch operand']
  %s0 = inlined_call_operand.vmem [shape: bf16[16,128], index: 0, kind: input, shape index: {}]
  %s1 = inlined_call_operand.vmem [shape: bf16[128,128], index: 1, kind: input, shape index: {}]
  %s2 = inlined_call_operand.vmem [shape: f32[1,128], index: 2, kind: input, shape index: {}]
  %s3 = inlined_call_operand.vmem [shape: bf16[128,128], index: 3, kind: input, shape index: {}]
  %s4 = inlined_call_operand.vmem [shape: f32[1,128], index: 4, kind: input, shape index: {}]
  %s5 = inlined_call_operand.vmem [shape: bf16[16,128], index: 5, kind: output, shape index: {0}]
  %s6 = inlined_call_operand.vmem [shape: f32[16,1], index: 6, kind: output, shape index: {1}]
  %7 = xla_tuple %s5, %s6
  %s8 = sld [smem:[#allocation0]]
  $region46: #{bengio_forward.1} parent=0
    _
  %s10 = ssub.s32 1, %s8
  %s11 = scalar_select 0, %s10, %s8
  // Predicated region
  $region2: #{bengio_forward.1} parent=0 // pred_check
    _
  $region3: #{bengio_forward.1} parent=0 // pred_check_branch
    %13 = sbr.rel (0) target = $region5
  $region4: #{bengio_forward.1} parent=0 // pred_region
    _
  $region5: #{bengio_forward.1} parent=0 // pred_fallthru
    _
  // Predicated region
  $region6: #{bengio_forward.1} parent=0 // pred_check
    _
  $region7: #{bengio_forward.1} parent=0 // pred_check_branch
    %15 = sbr.rel (0) target = $region9
  $region8: #{bengio_forward.1} parent=0 // pred_region
    _
  $region9: #{bengio_forward.1} parent=0 // pred_fallthru
    _
  // Predicated region
  $region10: #{bengio_forward.1} parent=0 // pred_check
    _
  $region11: #{bengio_forward.1} parent=0 // pred_check_branch
    %17 = sbr.rel (0) target = $region13
  $region12: #{bengio_forward.1} parent=0 // pred_region
    _
  $region13: #{bengio_forward.1} parent=0 // pred_fallthru
    _
  // Predicated region
  $region14: #{bengio_forward.1} parent=0 // pred_check
    _
  $region15: #{bengio_forward.1} parent=0 // pred_check_branch
    %19 = sbr.rel (0) target = $region17
  $region16: #{bengio_forward.1} parent=0 // pred_region
    _
  $region17: #{bengio_forward.1} parent=0 // pred_fallthru
    _
  // Predicated region
  $region18: #{bengio_forward.1} parent=0 // pred_check
    _
  $region19: #{bengio_forward.1} parent=0 // pred_check_branch
    %21 = sbr.rel (0) target = $region21
  $region20: #{bengio_forward.1} parent=0 // pred_region
    _
  $region21: #{bengio_forward.1} parent=0 // pred_fallthru
    _
  %p22 = scmp.eq.s32.totalorder 0, 0
  // Predicated region
  $region22: #{bengio_forward.1} parent=0 // pred_check
    %p23 = pneg %p22
  $region23: #{bengio_forward.1} parent=0 // pred_check_branch
    %25 = sbr.rel (%p23) target = $region25
  $region24: #{bengio_forward.1} parent=0 // pred_region
    %v26 = vld [vmem:[%s0] sm:$0xf]
    %v27 = vld [vmem:[%s0 + $0x4] sm:$0xf]
    %v28 = vld [vmem:[%s1] sm:$0xf]
    %v29 = vld [vmem:[%s1 + $0x4] sm:$0xf]
    %v30 = vld [vmem:[%s1 + $0x8] sm:$0xf]
    %v31 = vld [vmem:[%s1 + $0xc] sm:$0xf]
    %v32 = vld [vmem:[%s1 + $0x10] sm:$0xf]
    %v33 = vld [vmem:[%s1 + $0x14] sm:$0xf]
    %v34 = vld [vmem:[%s1 + $0x18] sm:$0xf]
    %v35 = vld [vmem:[%s1 + $0x1c] sm:$0xf]
    %v36 = vld [vmem:[%s1 + $0x20] sm:$0xf]
    %v37 = vld [vmem:[%s1 + $0x24] sm:$0xf]
    %v38 = vld [vmem:[%s1 + $0x28] sm:$0xf]
    %v39 = vld [vmem:[%s1 + $0x2c] sm:$0xf]
    %v40 = vld [vmem:[%s1 + $0x30] sm:$0xf]
    %v41 = vld [vmem:[%s1 + $0x34] sm:$0xf]
    %v42 = vld [vmem:[%s1 + $0x38] sm:$0xf]
    %v43 = vld [vmem:[%s1 + $0x3c] sm:$0xf]
    %v44 = vld [vmem:[%s2] sm:$0x1]
    %v46 = vperm.slane %v44, 0
    %v50 = vunpack.c.l.b16 %v26
    %v51 = vunpack.c.l.b16 %v27
    %v52 = vpack.c.b16 %v51, %v50
    %v70 = vunpack.c.l.b16 %v28
    %v71 = vunpack.c.l.b16 %v29
    %v72 = vunpack.c.l.b16 %v30
    %v73 = vunpack.c.l.b16 %v31
    %v74 = vunpack.c.l.b16 %v32
    %v75 = vunpack.c.l.b16 %v33
    %v76 = vunpack.c.l.b16 %v34
    %v77 = vunpack.c.l.b16 %v35
    %v78 = vunpack.c.l.b16 %v36
    %v79 = vunpack.c.l.b16 %v37
    %v80 = vunpack.c.l.b16 %v38
    %v81 = vunpack.c.l.b16 %v39
    %v82 = vunpack.c.l.b16 %v40
    %v83 = vunpack.c.l.b16 %v41
    %v84 = vunpack.c.l.b16 %v42
    %v85 = vunpack.c.l.b16 %v43
    %v86 = vpack.c.b16 %v71, %v70
    %v87 = vpack.c.b16 %v73, %v72
    %v88 = vpack.c.b16 %v75, %v74
    %v89 = vpack.c.b16 %v77, %v76
    %v90 = vpack.c.b16 %v79, %v78
    %v91 = vpack.c.b16 %v81, %v80
    %v92 = vpack.c.b16 %v83, %v82
    %v93 = vpack.c.b16 %v85, %v84
    %102 = vmatpush.bf16.msra.mxu0 %v93
    %103 = vmatpush.bf16.msra.mxu0 %v92
    %104 = vmatpush.bf16.msra.mxu0 %v91
    %105 = vmatpush.bf16.msra.mxu0 %v90
    %106 = vmatpush.bf16.msra.mxu0 %v89
    %107 = vmatpush.bf16.msra.mxu0 %v88
    %108 = vmatpush.bf16.msra.mxu0 %v87
    %109 = vmatpush.bf16.msra.mxu0 %v86
    %110 = vmatmul.bf16.gmra.mxu0 %v52
    %v111 = vpop.f32.mrf.mxu0
    %v112 = vadd.f32 %v46, %v111
    %v113 = vpop.f32.mrf.mxu0
    %v114 = vadd.f32 %v46, %v113
    %115 = vdwg.mxu0
    %v116 = vtanh.pop %v112
    %v117 = vtanh.pop %v114
    %v118 = vpack.c.bf16 %v116, %v116
    %v119 = vpack.c.bf16 %v117, %v117
    %120 = vst [vmem:[#allocation2] sm:$0xf] %v118
    %121 = vst [vmem:[#allocation2 + $0x4] sm:$0xf] %v119
    %vm122 = vcmask 7168
    %123 = vst.msk [vmem:[#allocation3] sm:$0xff] %vm122, -inf
    %124 = vst.msk [vmem:[#allocation3 + $0x8] sm:$0xff] %vm122, -inf
    %125 = vst.msk [vmem:[#allocation4] sm:$0xff] %vm122, 0.0
    %126 = vst.msk [vmem:[#allocation4 + $0x8] sm:$0xff] %vm122, 0.0
  $region25: #{bengio_forward.1} parent=0 // pred_fallthru
    _
  %v127 = vld [vmem:[#allocation2] sm:$0xf]
  %v128 = vld [vmem:[#allocation2 + $0x4] sm:$0xf]
  %v129 = vld [vmem:[%s3] sm:$0xf]
  %v130 = vld [vmem:[%s3 + $0x4] sm:$0xf]
  %v131 = vld [vmem:[%s3 + $0x8] sm:$0xf]
  %v132 = vld [vmem:[%s3 + $0xc] sm:$0xf]
  %v133 = vld [vmem:[%s3 + $0x10] sm:$0xf]
  %v134 = vld [vmem:[%s3 + $0x14] sm:$0xf]
  %v135 = vld [vmem:[%s3 + $0x18] sm:$0xf]
  %v136 = vld [vmem:[%s3 + $0x1c] sm:$0xf]
  %v137 = vld [vmem:[%s3 + $0x20] sm:$0xf]
  %v138 = vld [vmem:[%s3 + $0x24] sm:$0xf]
  %v139 = vld [vmem:[%s3 + $0x28] sm:$0xf]
  %v140 = vld [vmem:[%s3 + $0x2c] sm:$0xf]
  %v141 = vld [vmem:[%s3 + $0x30] sm:$0xf]
  %v142 = vld [vmem:[%s3 + $0x34] sm:$0xf]
  %v143 = vld [vmem:[%s3 + $0x38] sm:$0xf]
  %v144 = vld [vmem:[%s3 + $0x3c] sm:$0xf]
  %v145 = vld [vmem:[%s4] sm:$0x1]
  %v147 = vperm.slane %v145, 0
  %v151 = vunpack.c.l.b16 %v127
  %v152 = vunpack.c.l.b16 %v128
  %v153 = vpack.c.b16 %v152, %v151
  %v171 = vunpack.c.l.b16 %v129
  %v172 = vunpack.c.l.b16 %v130
  %v173 = vunpack.c.l.b16 %v131
  %v174 = vunpack.c.l.b16 %v132
  %v175 = vunpack.c.l.b16 %v133
  %v176 = vunpack.c.l.b16 %v134
  %v177 = vunpack.c.l.b16 %v135
  %v178 = vunpack.c.l.b16 %v136
  %v179 = vunpack.c.l.b16 %v137
  %v180 = vunpack.c.l.b16 %v138
  %v181 = vunpack.c.l.b16 %v139
  %v182 = vunpack.c.l.b16 %v140
  %v183 = vunpack.c.l.b16 %v141
  %v184 = vunpack.c.l.b16 %v142
  %v185 = vunpack.c.l.b16 %v143
  %v186 = vunpack.c.l.b16 %v144
  %v187 = vpack.c.b16 %v172, %v171
  %v188 = vpack.c.b16 %v174, %v173
  %v189 = vpack.c.b16 %v176, %v175
  %v190 = vpack.c.b16 %v178, %v177
  %v191 = vpack.c.b16 %v180, %v179
  %v192 = vpack.c.b16 %v182, %v181
  %v193 = vpack.c.b16 %v184, %v183
  %v194 = vpack.c.b16 %v186, %v185
  %203 = vmatpush.bf16.msra.mxu0 %v194
  %204 = vmatpush.bf16.msra.mxu0 %v193
  %205 = vmatpush.bf16.msra.mxu0 %v192
  %206 = vmatpush.bf16.msra.mxu0 %v191
  %207 = vmatpush.bf16.msra.mxu0 %v190
  %208 = vmatpush.bf16.msra.mxu0 %v189
  %209 = vmatpush.bf16.msra.mxu0 %v188
  %210 = vmatpush.bf16.msra.mxu0 %v187
  %211 = vmatmul.bf16.gmra.mxu0 %v153
  %v212 = vpop.f32.mrf.mxu0
  %v213 = vadd.f32 %v147, %v212
  %v214 = vpop.f32.mrf.mxu0
  %v215 = vadd.f32 %v147, %v214
  %216 = vdwg.mxu0
  %v217 = vld [vmem:[#allocation3] sm:$0xff]
  %v218 = vld [vmem:[#allocation3 + $0x8] sm:$0xff]
  %219 = vmax.xlane.f32.xlu0 %v213
  %v220 = vpop.xlane.xlu0 %219
  %221 = vmax.xlane.f32.xlu0 %v215
  %v222 = vpop.xlane.xlu0 %221
  %v223 = vmax.f32 %v217, %v220
  %v224 = vmax.f32 %v218, %v222
  %v225 = vsub.f32 %v217, %v223
  %v226 = vsub.f32 %v218, %v224
  %v227 = vmul.f32 %v225, 1.442695
  %v228 = vpow.pop %v227
  %v229 = vmul.f32 %v226, 1.442695
  %v230 = vpow.pop %v229
  %v231 = vld [vmem:[#allocation4] sm:$0xff]
  %v232 = vld [vmem:[#allocation4 + $0x8] sm:$0xff]
  %v233 = vmul.f32 %v228, %v231
  %v234 = vmul.f32 %v230, %v232
  %236 = vset.pattern.permute.xlu0 0
  %237 = vperm.xlu0 %236, %v223
  %v238 = vpop.permute.xlu0 %237
  %241 = vset.pattern.permute.xlu0 0
  %242 = vperm.xlu0 %241, %v224
  %v243 = vpop.permute.xlu0 %242
  %v245 = vsub.f32 %v213, %v238
  %v246 = vsub.f32 %v215, %v243
  %v247 = vmul.f32 %v245, 1.442695
  %v248 = vpow.pop %v247
  %v249 = vmul.f32 %v246, 1.442695
  %v250 = vpow.pop %v249
  %251 = vadd.xlane.f32.xlu0 %v248
  %v252 = vpop.xlane.xlu0 %251
  %253 = vadd.xlane.f32.xlu0 %v250
  %v254 = vpop.xlane.xlu0 %253
  %v255 = vadd.f32 %v233, %v252
  %v256 = vadd.f32 %v234, %v254
  %vm257 = vcmask 7168
  %258 = vst.msk [vmem:[#allocation4] sm:$0xff] %vm257, %v255
  %259 = vst.msk [vmem:[#allocation4 + $0x8] sm:$0xff] %vm257, %v256
  %260 = vst.msk [vmem:[#allocation3] sm:$0xff] %vm257, %v223
  %261 = vst.msk [vmem:[#allocation3 + $0x8] sm:$0xff] %vm257, %v224
  %v262 = vpack.c.bf16 %v213, %v213
  %v263 = vpack.c.bf16 %v215, %v215
  %264 = vst [vmem:[%s5] sm:$0xf] %v262
  %265 = vst [vmem:[%s5 + $0x4] sm:$0xf] %v263
  // Predicated region
  $region26: #{bengio_forward.1} parent=0 // pred_check
    %p266 = pneg %p22
  $region27: #{bengio_forward.1} parent=0 // pred_check_branch
    %268 = sbr.rel (%p266) target = $region29
  $region28: #{bengio_forward.1} parent=0 // pred_region
    %v269 = vld [vmem:[#allocation3] sm:$0xff]
    %v270 = vld [vmem:[#allocation3 + $0x8] sm:$0xff]
    %v271 = vld [vmem:[#allocation4] sm:$0xff]
    %v272 = vld [vmem:[#allocation4 + $0x8] sm:$0xff]
    %v273 = vlog2.pop %v271
    %v274 = vmul.f32 %v273, 0.6931472
    %v275 = vlog2.pop %v272
    %v276 = vmul.f32 %v275, 0.6931472
    %v277 = vadd.f32 %v269, %v274
    %v278 = vadd.f32 %v270, %v276
    %279 = vst.msk [vmem:[%s6] sm:$0xff] %vm257, %v277
    %280 = vst.msk [vmem:[%s6 + $0x8] sm:$0xff] %vm257, %v278
  $region29: #{bengio_forward.1} parent=0 // pred_fallthru
    _
  // Predicated region
  $region30: #{bengio_forward.1} parent=0 // pred_check
    _
  $region31: #{bengio_forward.1} parent=0 // pred_check_branch
    %282 = sbr.rel (0) target = $region33
  $region32: #{bengio_forward.1} parent=0 // pred_region
    _
  $region33: #{bengio_forward.1} parent=0 // pred_fallthru
    _
  // Predicated region
  $region34: #{bengio_forward.1} parent=0 // pred_check
    _
  $region35: #{bengio_forward.1} parent=0 // pred_check_branch
    %284 = sbr.rel (0) target = $region37
  $region36: #{bengio_forward.1} parent=0 // pred_region
    _
  $region37: #{bengio_forward.1} parent=0 // pred_fallthru
    _
  // Predicated region
  $region38: #{bengio_forward.1} parent=0 // pred_check
    _
  $region39: #{bengio_forward.1} parent=0 // pred_check_branch
    %286 = sbr.rel (0) target = $region41
  $region40: #{bengio_forward.1} parent=0 // pred_region
    _
  $region41: #{bengio_forward.1} parent=0 // pred_fallthru
    _
  // Predicated region
  $region42: #{bengio_forward.1} parent=0 // pred_check
    _
  $region43: #{bengio_forward.1} parent=0 // pred_check_branch
    %288 = sbr.rel (0) target = $region45
  $region44: #{bengio_forward.1} parent=0 // pred_region
    _
  $region45: #{bengio_forward.1} parent=0 // pred_fallthru
    _

</llo_original>
